<compile_context>
chip_gen: v6e
topology: v6e:2x2x1
jax: 0.10.0
libtpu: 0.0.40
codegen_flags: <defaults>
</compile_context>

<pallas_src>
import functools
import math

import jax
import jax.numpy as jnp
from jax import lax
from jax.experimental import pallas as pl
from jax.experimental.pallas import tpu as pltpu


def _cphdnn_kernel(x_ref, w0_ref, w1_ref, baux_ref, o_ref, *, pack, mxu_dtype):
    """Fused 3-layer MLP on a (tb, P*F) packed batch tile.

    baux rows: [0] = b0 tiled xP, [1] = b1 tiled xP, [2] = b2 broadcast,
               [3:3+P] = block-structured output weights (P, P*H).
    """
    x = x_ref[...]
    if mxu_dtype is not None:
        # Cast on the VMEM tile (VPU) -- the HBM->VMEM DMA stays f32, MXU runs bf16.
        x = x.astype(mxu_dtype)

    # Layer 0: Linear + ReLU (MXU, f32 accumulate; bias/ReLU on the VPU in f32).
    h = jnp.dot(x, w0_ref[...], preferred_element_type=jnp.float32)
    h = jnp.maximum(h + baux_ref[0:1, :], 0.0)

    # Layer 1: Linear + ReLU.
    h = jnp.dot(h.astype(w1_ref.dtype), w1_ref[...], preferred_element_type=jnp.float32)
    h = jnp.maximum(h + baux_ref[1:2, :], 0.0)

    # Output layer (no nonlinearity), NT form so the result is lane-dense along the batch:
    #   (P, Hp) x (tb, Hp)^T -> (P, tb)     [risk of sample (row*P + p) at [p, row]]
    w2b = baux_ref[3:3 + pack, :]
    if mxu_dtype is not None:
        w2b = w2b.astype(mxu_dtype)
        h = h.astype(mxu_dtype)
    risk = lax.dot_general(w2b, h, (((1,), (1,)), ((), ())),
                           preferred_element_type=jnp.float32)
    risk = risk + baux_ref[2:3, 0:1]          # scalar output bias
    o_ref[0] = risk.astype(o_ref.dtype)


def cphdnn_forward(x, params, *, block_rows=4096, min_blocks=1,
                   mxu_input_dtype=jnp.bfloat16):
    """CPHDNN stack forward in a single pallas_call.

    x: (B, F) float32
    params: w0 (F,H), b0 (1,H), w1 (H,H), b1 (1,H), w2 (H,1), b2 (1,1)
    block_rows: batch tile measured in PACKED rows (P samples per row).
    min_blocks: set to 2 on v7x so the 'parallel' batch axis shards over both TensorCores
                (leave at 1 on single-TC v5e/v6e).
    mxu_input_dtype: MXU operand dtype (default bf16); accumulation is always f32.
    Returns risk: (B, 1) float32.
    """
    B, F = x.shape
    H = params["w0"].shape[1]

    # Pack P samples per vreg row (P*F and P*H lanes). P=1 for wide layers.
    P = max(1, min(128 // max(F, 1), 128 // max(H, 1)))
    Fp, Hp = P * F, P * H

    # Pad the batch to a multiple of P (no-op copy in the common case B % P == 0).
    Bp = ((B + P - 1) // P) * P
    xin = x if Bp == B else jnp.pad(x, ((0, Bp - B), (0, 0)))
    rows = Bp // P
    xp = xin.reshape(rows, Fp)                     # contiguous re-view, no data movement

    # Block-diagonal weights (built once host-side, tiny & VMEM-resident in the kernel).
    eye = jnp.eye(P, dtype=jnp.float32)
    w0b = jnp.kron(eye, params["w0"].astype(jnp.float32))       # (Fp, Hp)
    w1b = jnp.kron(eye, params["w1"].astype(jnp.float32))       # (Hp, Hp)
    w2b = jnp.kron(eye, params["w2"].astype(jnp.float32).T)     # (P, Hp)
    baux = jnp.concatenate(
        [
            jnp.tile(params["b0"].astype(jnp.float32), (1, P)),          # (1, Hp)
            jnp.tile(params["b1"].astype(jnp.float32), (1, P)),          # (1, Hp)
            jnp.broadcast_to(params["b2"].astype(jnp.float32), (1, Hp)), # (1, Hp)
            w2b,                                                         # (P, Hp)
        ],
        axis=0,
    )                                                                    # (3+P, Hp)

    if mxu_input_dtype is not None:
        w0b = w0b.astype(mxu_input_dtype)
        w1b = w1b.astype(mxu_input_dtype)

    # Batch tiling over packed rows: one block whenever it fits (per-step overhead
    # dominates a kernel this thin); ragged last block handled by Pallas boundary blocks.
    if rows <= block_rows and min_blocks <= 1:
        nb, tb = 1, rows
    else:
        target_nb = max(min_blocks, pl.cdiv(rows, block_rows))
        tb = max(8, ((pl.cdiv(rows, target_nb) + 7) // 8) * 8)   # sublane multiple
        nb = pl.cdiv(rows, tb)

    # NOTE(v5e): if the x DMA ever shows up exposed at very large tb, add
    # pipeline_mode=pl.Buffered(3) to the x BlockSpec (VMEM headroom is huge here).
    out = pl.pallas_call(
        functools.partial(_cphdnn_kernel, pack=P, mxu_dtype=mxu_input_dtype),
        out_shape=jax.ShapeDtypeStruct((nb, P, tb), jnp.float32),
        grid=(nb,),
        in_specs=[
            pl.BlockSpec((tb, Fp), lambda i: (i, 0)),        # x: batch-tiled
            pl.BlockSpec((Fp, Hp), lambda i: (0, 0)),        # w0 block-diag: resident
            pl.BlockSpec((Hp, Hp), lambda i: (0, 0)),        # w1 block-diag: resident
            pl.BlockSpec((3 + P, Hp), lambda i: (0, 0)),     # packed biases + w2 blocks
        ],
        out_specs=pl.BlockSpec((1, P, tb), lambda i: (i, 0, 0)),
        compiler_params=pltpu.CompilerParams(
            dimension_semantics=("parallel",),               # batch axis -> both TCs on v7x
        ),
    )(xp, w0b, w1b, baux)

    # out[i, p, r] = risk of sample (i*tb + r)*P + p ; reorder (tiny array) and trim.
    risk = out.transpose(0, 2, 1).reshape(-1, 1)[:B]
    return risk


def init_params(key, input_size, width):
    """torch.nn.Linear-style init: U[-1/sqrt(fan_in), 1/sqrt(fan_in)]."""
    dims = [(input_size, width), (width, width), (width, 1)]
    params = {}
    for i, (fan_in, fan_out) in enumerate(dims):
        key, kw, kb = jax.random.split(key, 3)
        bound = 1.0 / math.sqrt(fan_in)
        params[f"w{i}"] = jax.random.uniform(
            kw, (fan_in, fan_out), jnp.float32, minval=-bound, maxval=bound)
        params[f"b{i}"] = jax.random.uniform(
            kb, (1, fan_out), jnp.float32, minval=-bound, maxval=bound)
    return params


def reference_forward(x, params):
    h = jnp.maximum(x @ params["w0"] + params["b0"], 0.0)
    h = jnp.maximum(h @ params["w1"] + params["b1"], 0.0)
    return h @ params["w2"] + params["b2"]


# TODO(synk): Cox partial-likelihood loss, Adam training loops and c-index evaluation from
# the PyTorch module are host-side training code, not part of the forward-pass kernel.

if __name__ == "__main__":
    key = jax.random.PRNGKey(0)
    k_x, k_p, k_b1, k_b2 = jax.random.split(key, 4)

    B = 24            # CPH training batch size used in _train
    INPUT_SIZE = 32   # params['input_size']
    WIDTH = 32        # params['W']

    params = init_params(k_p, INPUT_SIZE, WIDTH)

    # Small batch, f32 MXU path (single block) -- tight tolerance vs JAX reference.
    x = jax.random.normal(k_x, (B, INPUT_SIZE), dtype=jnp.float32)
    risk = jax.block_until_ready(cphdnn_forward(x, params, mxu_input_dtype=None))
    ref = reference_forward(x, params)
    assert risk.shape == (B, 1)
    assert jnp.allclose(risk, ref, atol=1e-4, rtol=1e-4), "mismatch (f32, small batch)"

    # Larger batch, default bf16 MXU path, single block (whole batch fits one tile).
    BB = 3000
    xb = jax.random.normal(k_b1, (BB, INPUT_SIZE), dtype=jnp.float32)
    risk_b = jax.block_until_ready(cphdnn_forward(xb, params))
    ref_b = reference_forward(xb, params)
    assert risk_b.shape == (BB, 1)
    assert jnp.allclose(risk_b, ref_b, atol=5e-2, rtol=5e-2), "mismatch (bf16, single block)"

    # Multi-block grid with a ragged last block + min_blocks=2 (v7x dual-TC sharding path).
    BB2 = 10000
    xc = jax.random.normal(k_b2, (BB2, INPUT_SIZE), dtype=jnp.float32)
    risk_c = jax.block_until_ready(
        cphdnn_forward(xc, params, block_rows=1024, min_blocks=2))
    ref_c = reference_forward(xc, params)
    assert risk_c.shape == (BB2, 1)
    assert jnp.allclose(risk_c, ref_c, atol=5e-2, rtol=5e-2), "mismatch (bf16, multi-block)"

    print("KERNEL_OK")
</pallas_src>

<mosaic_0001>
module attributes {stable_mosaic.version = 11 : i64} {
  func.func @_cphdnn_kernel(%arg0: i32, %arg1: memref<6x128xf32, #tpu.memory_space<vmem>>, %arg2: memref<128x128xf32, #tpu.memory_space<vmem>>, %arg3: memref<128x128xf32, #tpu.memory_space<vmem>>, %arg4: memref<7x128xf32, #tpu.memory_space<vmem>>, %arg5: memref<1x4x6xf32, #tpu.memory_space<vmem>>) attributes {dimension_semantics = [#tpu.dimension_semantics<parallel>], iteration_bounds = array<i64: 1>, scalar_prefetch = 0 : i64, scratch_operands = 0 : i64, tpu.core_type = #tpu.core_type<tc>, window_params = [{transform_indices = @transform_0, window_bounds = array<i64: 6, 128>}, {pipeline_mode = #tpu.pipeline_mode<synchronous>, transform_indices = @transform_1, window_bounds = array<i64: 128, 128>}, {pipeline_mode = #tpu.pipeline_mode<synchronous>, transform_indices = @transform_2, window_bounds = array<i64: 128, 128>}, {pipeline_mode = #tpu.pipeline_mode<synchronous>, transform_indices = @transform_3, window_bounds = array<i64: 7, 128>}, {transform_indices = @transform_4, window_bounds = array<i64: 1, 4, 6>}]} {
    %c0 = arith.constant 0 : index
    %c0_0 = arith.constant 0 : index
    %0 = vector.load %arg1[%c0, %c0_0] : memref<6x128xf32, #tpu.memory_space<vmem>>, vector<6x128xf32>
    %c0_1 = arith.constant 0 : index
    %c0_2 = arith.constant 0 : index
    %1 = vector.load %arg2[%c0_1, %c0_2] : memref<128x128xf32, #tpu.memory_space<vmem>>, vector<128x128xf32>
    %cst = arith.constant dense<0.000000e+00> : vector<6x128xf32>
    %2 = tpu.matmul %0, %1, %cst {dimension_numbers = #tpu.dot_dimension_numbers<[1], [0], [0], [1], [0, 0, 1, 1], [], []>} : vector<6x128xf32>, vector<128x128xf32>, vector<6x128xf32> -> vector<6x128xf32>
    %c0_3 = arith.constant 0 : index
    %c0_4 = arith.constant 0 : index
    %3 = vector.load %arg4[%c0_3, %c0_4] : memref<7x128xf32, #tpu.memory_space<vmem>>, vector<1x128xf32>
    %4 = vector.broadcast %3 : vector<1x128xf32> to vector<6x128xf32>
    %5 = arith.addf %2, %4 : vector<6x128xf32>
    %cst_5 = arith.constant 0.000000e+00 : f32
    %6 = vector.broadcast %cst_5 : f32 to vector<6x128xf32>
    %7 = arith.maximumf %5, %6 : vector<6x128xf32>
    %c0_6 = arith.constant 0 : index
    %c0_7 = arith.constant 0 : index
    %8 = vector.load %arg3[%c0_6, %c0_7] : memref<128x128xf32, #tpu.memory_space<vmem>>, vector<128x128xf32>
    %cst_8 = arith.constant dense<0.000000e+00> : vector<6x128xf32>
    %9 = tpu.matmul %7, %8, %cst_8 {dimension_numbers = #tpu.dot_dimension_numbers<[1], [0], [0], [1], [0, 0, 1, 1], [], []>} : vector<6x128xf32>, vector<128x128xf32>, vector<6x128xf32> -> vector<6x128xf32>
    %c1 = arith.constant 1 : index
    %c0_9 = arith.constant 0 : index
    %10 = vector.load %arg4[%c1, %c0_9] : memref<7x128xf32, #tpu.memory_space<vmem>>, vector<1x128xf32>
    %11 = vector.broadcast %10 : vector<1x128xf32> to vector<6x128xf32>
    %12 = arith.addf %9, %11 : vector<6x128xf32>
    %cst_10 = arith.constant 0.000000e+00 : f32
    %13 = vector.broadcast %cst_10 : f32 to vector<6x128xf32>
    %14 = arith.maximumf %12, %13 : vector<6x128xf32>
    %c3 = arith.constant 3 : index
    %c0_11 = arith.constant 0 : index
    %15 = vector.load %arg4[%c3, %c0_11] : memref<7x128xf32, #tpu.memory_space<vmem>>, vector<4x128xf32>
    %cst_12 = arith.constant dense<0.000000e+00> : vector<4x6xf32>
    %16 = tpu.matmul %15, %14, %cst_12 {dimension_numbers = #tpu.dot_dimension_numbers<[1], [1], [0], [0], [0, 0, 1, 0], [], []>} : vector<4x128xf32>, vector<6x128xf32>, vector<4x6xf32> -> vector<4x6xf32>
    %c2 = arith.constant 2 : index
    %c0_13 = arith.constant 0 : index
    %17 = vector.load %arg4[%c2, %c0_13] : memref<7x128xf32, #tpu.memory_space<vmem>>, vector<1x1xf32>
    %18 = vector.broadcast %17 : vector<1x1xf32> to vector<4x6xf32>
    %19 = arith.addf %16, %18 : vector<4x6xf32>
    %c0_14 = arith.constant 0 : index
    %c0_15 = arith.constant 0 : index
    %c0_16 = arith.constant 0 : index
    %20 = vector.load %arg5[%c0_14, %c0_15, %c0_16] : memref<1x4x6xf32, #tpu.memory_space<vmem>>, vector<1x4x6xf32>
    %21 = vector.shape_cast %20 : vector<1x4x6xf32> to vector<4x6xf32>
    %22 = vector.shape_cast %19 : vector<4x6xf32> to vector<1x4x6xf32>
    tpu.vector_store %arg5[%c0_14, %c0_15, %c0_16], %22 {strides = array<i32>} : memref<1x4x6xf32, #tpu.memory_space<vmem>>, vector<1x4x6xf32>,
    return
  }
  func.func @transform_0(%arg0: i32) -> (i32, i32) {
    %c0_i32 = arith.constant 0 : i32
    %c0_i32_0 = arith.constant 0 : i32
    return %arg0, %c0_i32 : i32, i32
  }
  func.func @transform_1(%arg0: i32) -> (i32, i32) {
    %c0_i32 = arith.constant 0 : i32
    %c0_i32_0 = arith.constant 0 : i32
    %c0_i32_1 = arith.constant 0 : i32
    return %c0_i32, %c0_i32_0 : i32, i32
  }
  func.func @transform_2(%arg0: i32) -> (i32, i32) {
    %c0_i32 = arith.constant 0 : i32
    %c0_i32_0 = arith.constant 0 : i32
    %c0_i32_1 = arith.constant 0 : i32
    return %c0_i32, %c0_i32_0 : i32, i32
  }
  func.func @transform_3(%arg0: i32) -> (i32, i32) {
    %c0_i32 = arith.constant 0 : i32
    %c0_i32_0 = arith.constant 0 : i32
    %c0_i32_1 = arith.constant 0 : i32
    return %c0_i32, %c0_i32_0 : i32, i32
  }
  func.func @transform_4(%arg0: i32) -> (i32, i32, i32) {
    %c0_i32 = arith.constant 0 : i32
    %c0_i32_0 = arith.constant 0 : i32
    %c0_i32_1 = arith.constant 0 : i32
    return %arg0, %c0_i32, %c0_i32_0 : i32, i32, i32
  }
}

</mosaic_0001>

<llo_original>
// kernel: tpu_custom_call.1
$region0: #{tpu_custom_call.1}
  #allocation0 [shape = 'u32[]', space=smem, size = 0x4, offset = 0x4, fixed_abs, tag = 'smem constant byte address 0x4 - core index']
  #allocation1 [shape = 'u32[144,128]{1,0:T(1,128)}', space=vmem, size = 0x12000, scoped, tag = 'internal scratch']
  %s0 = inlined_call_operand.hbm [shape: f32[6,128], index: 0, kind: input, shape index: {}]
  %s1 = inlined_call_operand.hbm [shape: f32[128,128], index: 1, kind: input, shape index: {}]
  %s2 = inlined_call_operand.hbm [shape: f32[128,128], index: 2, kind: input, shape index: {}]
  %s3 = inlined_call_operand.hbm [shape: f32[7,128], index: 3, kind: input, shape index: {}]
  %s4 = inlined_call_operand.hbm [shape: f32[1,4,6], index: 4, kind: output, shape index: {}]
  %s5 = sld [smem:[#allocation0]]
  $region42: #{tpu_custom_call.1} parent=0
    _
  %s7 = ssub.s32 1, %s5
  %s8 = scalar_select 0, %s7, %s5
  $region1: #{tpu_custom_call.1} parent=0
    #allocation2 [shape = 'u8[4096]{0}', space=vmem, size = 0x1000, scoped, tag = 'input window, operand 0, single buffered']
    #allocation3 [shape = 's32[1]{0}', space=sflag, size = 0x4, scoped, tag = 'scoped memory for tpu_custom_call.1']
    #allocation4 [shape = 's32[1]{0}', space=sflag, size = 0x4, scoped, tag = 'scoped memory for tpu_custom_call.1']
    #allocation5 [shape = 'u8[65536]{0}', space=vmem, size = 0x10000, scoped, tag = 'input window, operand 1, single buffered']
    #allocation6 [shape = 's32[1]{0}', space=sflag, size = 0x4, scoped, tag = 'scoped memory for tpu_custom_call.1']
    #allocation7 [shape = 'u8[65536]{0}', space=vmem, size = 0x10000, scoped, tag = 'input window, operand 2, single buffered']
    #allocation8 [shape = 'u8[4096]{0}', space=vmem, size = 0x1000, scoped, tag = 'input window, operand 3, single buffered']
    #allocation9 [shape = 's32[1]{0}', space=sflag, size = 0x4, scoped, tag = 'scoped memory for tpu_custom_call.1']
    #allocation10 [shape = 'u8[2048]{0}', space=vmem, size = 0x800, scoped, tag = 'output window, operand 0, single buffered']
    %9 = vsyncpa [#allocation3], 0
    %10 = vsyncpa [#allocation6], 0
    %11 = vsyncpa [#allocation9], 0
    %12 = vsyncpa [#allocation4], 0
    // Predicated region
    $region2: #{tpu_custom_call.1} parent=1 // pred_check
      _
    $region3: #{tpu_custom_call.1} parent=1 // pred_check_branch
      %14 = sbr.rel (0) target = $region5
    $region4: #{tpu_custom_call.1} parent=1 // pred_region
      %s16 = ssub.s32 128, 128
      %17 = vsyncadd [#allocation3], %s16
      %s19 = sshll.u32 [#allocation2], 4
      %s20 = int_to_ptr.vmem [resolvable:$true] %s19
      %22 = dma.hbm_to_vmem [thread:$0]  %s0, 128, %s20, [#allocation3]
    $region5: #{tpu_custom_call.1} parent=1 // pred_fallthru
      _
    // Predicated region
    $region6: #{tpu_custom_call.1} parent=1 // pred_check
      _
    $region7: #{tpu_custom_call.1} parent=1 // pred_check_branch
      %24 = sbr.rel (0) target = $region9
    $region8: #{tpu_custom_call.1} parent=1 // pred_region
      %s26 = ssub.s32 2048, 2048
      %27 = vsyncadd [#allocation6], %s26
      %s28 = sshll.u32 [#allocation5], 4
      %s29 = int_to_ptr.vmem [resolvable:$true] %s28
      %34 = dma.hbm_to_vmem [thread:$0]  %s1, 2048, %s29, [#allocation6], 128, 128, 8
    $region9: #{tpu_custom_call.1} parent=1 // pred_fallthru
      _
    // Predicated region
    $region10: #{tpu_custom_call.1} parent=1 // pred_check
      _
    $region11: #{tpu_custom_call.1} parent=1 // pred_check_branch
      %36 = sbr.rel (0) target = $region13
    $region12: #{tpu_custom_call.1} parent=1 // pred_region
      %s38 = ssub.s32 2048, 2048
      %39 = vsyncadd [#allocation6], %s38
      %s40 = sshll.u32 [#allocation7], 4
      %s41 = int_to_ptr.vmem [resolvable:$true] %s40
      %46 = dma.hbm_to_vmem [thread:$0]  %s2, 2048, %s41, [#allocation6], 128, 128, 8
    $region13: #{tpu_custom_call.1} parent=1 // pred_fallthru
      _
    // Predicated region
    $region14: #{tpu_custom_call.1} parent=1 // pred_check
      _
    $region15: #{tpu_custom_call.1} parent=1 // pred_check_branch
      %48 = sbr.rel (0) target = $region17
    $region16: #{tpu_custom_call.1} parent=1 // pred_region
      %s50 = ssub.s32 128, 128
      %51 = vsyncadd [#allocation9], %s50
      %s53 = sshll.u32 [#allocation8], 4
      %s54 = int_to_ptr.vmem [resolvable:$true] %s53
      %56 = dma.hbm_to_vmem [thread:$0]  %s3, 128, %s54, [#allocation9]
    $region17: #{tpu_custom_call.1} parent=1 // pred_fallthru
      _
    // Predicated region
    $region18: #{tpu_custom_call.1} parent=1 // pred_check
      _
    $region19: #{tpu_custom_call.1} parent=1 // pred_check_branch
      %58 = sbr.rel (0) target = $region21
    $region20: #{tpu_custom_call.1} parent=1 // pred_region
      %59 = dma.done [#allocation3], 128
    $region21: #{tpu_custom_call.1} parent=1 // pred_fallthru
      _
    // Predicated region
    $region22: #{tpu_custom_call.1} parent=1 // pred_check
      _
    $region23: #{tpu_custom_call.1} parent=1 // pred_check_branch
      %61 = sbr.rel (0) target = $region25
    $region24: #{tpu_custom_call.1} parent=1 // pred_region
      %62 = dma.done [#allocation6], 2048
    $region25: #{tpu_custom_call.1} parent=1 // pred_fallthru
      _
    // Predicated region
    $region26: #{tpu_custom_call.1} parent=1 // pred_check
      _
    $region27: #{tpu_custom_call.1} parent=1 // pred_check_branch
      %64 = sbr.rel (0) target = $region29
    $region28: #{tpu_custom_call.1} parent=1 // pred_region
      %65 = dma.done [#allocation6], 2048
    $region29: #{tpu_custom_call.1} parent=1 // pred_fallthru
      _
    // Predicated region
    $region30: #{tpu_custom_call.1} parent=1 // pred_check
      _
    $region31: #{tpu_custom_call.1} parent=1 // pred_check_branch
      %67 = sbr.rel (0) target = $region33
    $region32: #{tpu_custom_call.1} parent=1 // pred_region
      %68 = dma.done [#allocation9], 128
    $region33: #{tpu_custom_call.1} parent=1 // pred_fallthru
      _
    %v69 = vld [vmem:[#allocation2] sm:$0x3f]
    %v70 = vld [vmem:[#allocation5] sm:$0xff]
    %v71 = vld [vmem:[#allocation5 + $0x8] sm:$0xff]
    %v72 = vld [vmem:[#allocation5 + $0x10] sm:$0xff]
    %v73 = vld [vmem:[#allocation5 + $0x18] sm:$0xff]
    %v74 = vld [vmem:[#allocation5 + $0x20] sm:$0xff]
    %v75 = vld [vmem:[#allocation5 + $0x28] sm:$0xff]
    %v76 = vld [vmem:[#allocation5 + $0x30] sm:$0xff]
    %v77 = vld [vmem:[#allocation5 + $0x38] sm:$0xff]
    %v78 = vld [vmem:[#allocation5 + $0x40] sm:$0xff]
    %v79 = vld [vmem:[#allocation5 + $0x48] sm:$0xff]
    %v80 = vld [vmem:[#allocation5 + $0x50] sm:$0xff]
    %v81 = vld [vmem:[#allocation5 + $0x58] sm:$0xff]
    %v82 = vld [vmem:[#allocation5 + $0x60] sm:$0xff]
    %v83 = vld [vmem:[#allocation5 + $0x68] sm:$0xff]
    %v84 = vld [vmem:[#allocation5 + $0x70] sm:$0xff]
    %v85 = vld [vmem:[#allocation5 + $0x78] sm:$0xff]
    %v86 = vld [vmem:[#allocation8] sm:$0x1]
    %v87 = vlaneseq
    %v88 = vshrl.u32 %v87, 7
    %v89 = vsub.s32 0, %v88
    %v90 = vrot.slane %v86, %v89
    %91 = vmatprep.subr.mxu0 0.0
    %92 = vmatpush1.msra.mxu0 %v85
    %93 = vmatprep.subr.mxu0 0.0
    %94 = vmatpush1.msra.mxu0 %v84
    %95 = vmatprep.subr.mxu0 0.0
    %96 = vmatpush1.msra.mxu0 %v83
    %97 = vmatprep.subr.mxu0 0.0
    %98 = vmatpush1.msra.mxu0 %v82
    %99 = vmatprep.subr.mxu0 0.0
    %100 = vmatpush1.msra.mxu0 %v81
    %101 = vmatprep.subr.mxu0 0.0
    %102 = vmatpush1.msra.mxu0 %v80
    %103 = vmatprep.subr.mxu0 0.0
    %104 = vmatpush1.msra.mxu0 %v79
    %105 = vmatprep.subr.mxu0 0.0
    %106 = vmatpush1.msra.mxu0 %v78
    %107 = vmatprep.subr.mxu0 0.0
    %108 = vmatpush1.msra.mxu0 %v77
    %109 = vmatprep.subr.mxu0 0.0
    %110 = vmatpush1.msra.mxu0 %v76
    %111 = vmatprep.subr.mxu0 0.0
    %112 = vmatpush1.msra.mxu0 %v75
    %113 = vmatprep.subr.mxu0 0.0
    %114 = vmatpush1.msra.mxu0 %v74
    %115 = vmatprep.subr.mxu0 0.0
    %116 = vmatpush1.msra.mxu0 %v73
    %117 = vmatprep.subr.mxu0 0.0
    %118 = vmatpush1.msra.mxu0 %v72
    %119 = vmatprep.subr.mxu0 0.0
    %120 = vmatpush1.msra.mxu0 %v71
    %121 = vmatprep.subr.mxu0 0.0
    %122 = vmatpush1.msra.mxu0 %v70
    %123 = vmatprep.subr.mxu0 0.0
    %124 = vmatpush2.msra.mxu0 0.0
    %125 = vmatprep.subr.mxu0 0.0
    %126 = vmatpush2.msra.mxu0 0.0
    %127 = vmatprep.subr.mxu0 0.0
    %128 = vmatpush2.msra.mxu0 0.0
    %129 = vmatprep.subr.mxu0 0.0
    %130 = vmatpush2.msra.mxu0 0.0
    %131 = vmatprep.subr.mxu0 0.0
    %132 = vmatpush2.msra.mxu0 0.0
    %133 = vmatprep.subr.mxu0 0.0
    %134 = vmatpush2.msra.mxu0 0.0
    %135 = vmatprep.subr.mxu0 0.0
    %136 = vmatpush2.msra.mxu0 0.0
    %137 = vmatprep.subr.mxu0 0.0
    %138 = vmatpush2.msra.mxu0 0.0
    %139 = vmatprep.subr.mxu0 0.0
    %140 = vmatpush2.msra.mxu0 0.0
    %141 = vmatprep.subr.mxu0 0.0
    %142 = vmatpush2.msra.mxu0 0.0
    %143 = vmatprep.subr.mxu0 0.0
    %144 = vmatpush2.msra.mxu0 0.0
    %145 = vmatprep.subr.mxu0 0.0
    %146 = vmatpush2.msra.mxu0 0.0
    %147 = vmatprep.subr.mxu0 0.0
    %148 = vmatpush2.msra.mxu0 0.0
    %149 = vmatprep.subr.mxu0 0.0
    %150 = vmatpush2.msra.mxu0 0.0
    %151 = vmatprep.subr.mxu0 0.0
    %152 = vmatpush2.msra.mxu0 0.0
    %153 = vmatprep.subr.mxu0 0.0
    %154 = vmatpush2.msra.mxu0 0.0
    %155 = vmatprep.mubr.f32.mxu0 0.0
    %156 = vmatmul.mubr.f32.gmra.mxu0 %v69
    %v157 = vpop.f32.mrf.mxu0
    %v158 = vadd.f32 %v90, %v157
    %v159 = vpop.f32.mrf.mxu0
    %160 = vdwg.mxu0
    %v161 = vmax.f32 %v158, 0.0
    %v162 = vld [vmem:[#allocation7] sm:$0xff]
    %v163 = vld [vmem:[#allocation7 + $0x8] sm:$0xff]
    %v164 = vld [vmem:[#allocation7 + $0x10] sm:$0xff]
    %v165 = vld [vmem:[#allocation7 + $0x18] sm:$0xff]
    %v166 = vld [vmem:[#allocation7 + $0x20] sm:$0xff]
    %v167 = vld [vmem:[#allocation7 + $0x28] sm:$0xff]
    %v168 = vld [vmem:[#allocation7 + $0x30] sm:$0xff]
    %v169 = vld [vmem:[#allocation7 + $0x38] sm:$0xff]
    %v170 = vld [vmem:[#allocation7 + $0x40] sm:$0xff]
    %v171 = vld [vmem:[#allocation7 + $0x48] sm:$0xff]
    %v172 = vld [vmem:[#allocation7 + $0x50] sm:$0xff]
    %v173 = vld [vmem:[#allocation7 + $0x58] sm:$0xff]
    %v174 = vld [vmem:[#allocation7 + $0x60] sm:$0xff]
    %v175 = vld [vmem:[#allocation7 + $0x68] sm:$0xff]
    %v176 = vld [vmem:[#allocation7 + $0x70] sm:$0xff]
    %v177 = vld [vmem:[#allocation7 + $0x78] sm:$0xff]
    %v178 = vld [vmem:[#allocation8 + $0x1] sm:$0x1]
    %v179 = vlaneseq
    %v180 = vshrl.u32 %v179, 7
    %v181 = vsub.s32 0, %v180
    %v182 = vrot.slane %v178, %v181
    %183 = vmatprep.subr.mxu0 0.0
    %184 = vmatpush1.msra.mxu0 %v177
    %185 = vmatprep.subr.mxu0 0.0
    %186 = vmatpush1.msra.mxu0 %v176
    %187 = vmatprep.subr.mxu0 0.0
    %188 = vmatpush1.msra.mxu0 %v175
    %189 = vmatprep.subr.mxu0 0.0
    %190 = vmatpush1.msra.mxu0 %v174
    %191 = vmatprep.subr.mxu0 0.0
    %192 = vmatpush1.msra.mxu0 %v173
    %193 = vmatprep.subr.mxu0 0.0
    %194 = vmatpush1.msra.mxu0 %v172
    %195 = vmatprep.subr.mxu0 0.0
    %196 = vmatpush1.msra.mxu0 %v171
    %197 = vmatprep.subr.mxu0 0.0
    %198 = vmatpush1.msra.mxu0 %v170
    %199 = vmatprep.subr.mxu0 0.0
    %200 = vmatpush1.msra.mxu0 %v169
    %201 = vmatprep.subr.mxu0 0.0
    %202 = vmatpush1.msra.mxu0 %v168
    %203 = vmatprep.subr.mxu0 0.0
    %204 = vmatpush1.msra.mxu0 %v167
    %205 = vmatprep.subr.mxu0 0.0
    %206 = vmatpush1.msra.mxu0 %v166
    %207 = vmatprep.subr.mxu0 0.0
    %208 = vmatpush1.msra.mxu0 %v165
    %209 = vmatprep.subr.mxu0 0.0
    %210 = vmatpush1.msra.mxu0 %v164
    %211 = vmatprep.subr.mxu0 0.0
    %212 = vmatpush1.msra.mxu0 %v163
    %213 = vmatprep.subr.mxu0 0.0
    %214 = vmatpush1.msra.mxu0 %v162
    %215 = vmatprep.subr.mxu0 0.0
    %216 = vmatpush2.msra.mxu0 0.0
    %217 = vmatprep.subr.mxu0 0.0
    %218 = vmatpush2.msra.mxu0 0.0
    %219 = vmatprep.subr.mxu0 0.0
    %220 = vmatpush2.msra.mxu0 0.0
    %221 = vmatprep.subr.mxu0 0.0
    %222 = vmatpush2.msra.mxu0 0.0
    %223 = vmatprep.subr.mxu0 0.0
    %224 = vmatpush2.msra.mxu0 0.0
    %225 = vmatprep.subr.mxu0 0.0
    %226 = vmatpush2.msra.mxu0 0.0
    %227 = vmatprep.subr.mxu0 0.0
    %228 = vmatpush2.msra.mxu0 0.0
    %229 = vmatprep.subr.mxu0 0.0
    %230 = vmatpush2.msra.mxu0 0.0
    %231 = vmatprep.subr.mxu0 0.0
    %232 = vmatpush2.msra.mxu0 0.0
    %233 = vmatprep.subr.mxu0 0.0
    %234 = vmatpush2.msra.mxu0 0.0
    %235 = vmatprep.subr.mxu0 0.0
    %236 = vmatpush2.msra.mxu0 0.0
    %237 = vmatprep.subr.mxu0 0.0
    %238 = vmatpush2.msra.mxu0 0.0
    %239 = vmatprep.subr.mxu0 0.0
    %240 = vmatpush2.msra.mxu0 0.0
    %241 = vmatprep.subr.mxu0 0.0
    %242 = vmatpush2.msra.mxu0 0.0
    %243 = vmatprep.subr.mxu0 0.0
    %244 = vmatpush2.msra.mxu0 0.0
    %245 = vmatprep.subr.mxu0 0.0
    %246 = vmatpush2.msra.mxu0 0.0
    %247 = vmatprep.mubr.f32.mxu0 0.0
    %248 = vmatmul.mubr.f32.gmra.mxu0 %v161
    %v249 = vpop.f32.mrf.mxu0
    %v250 = vadd.f32 %v182, %v249
    %v251 = vpop.f32.mrf.mxu0
    %252 = vdwg.mxu0
    %v253 = vmax.f32 %v250, 0.0
    %v254 = vld [vmem:[#allocation8 + $0x3] sm:$0xf]
    %v255 = vld [vmem:[#allocation8 + $0x2] sm:$0x1]
    %s257 = vtos %v255
    %v258 = vstv %s257
    %260 = vmatprep.subr.mxu0 0.0
    %261 = vmatpush1.xpose.msra.mxu0 0.0
    %262 = vmatprep.subr.mxu0 0.0
    %263 = vmatpush1.xpose.msra.mxu0 0.0
    %264 = vmatprep.subr.mxu0 0.0
    %265 = vmatpush1.xpose.msra.mxu0 0.0
    %266 = vmatprep.subr.mxu0 0.0
    %267 = vmatpush1.xpose.msra.mxu0 0.0
    %268 = vmatprep.subr.mxu0 0.0
    %269 = vmatpush1.xpose.msra.mxu0 0.0
    %270 = vmatprep.subr.mxu0 0.0
    %271 = vmatpush1.xpose.msra.mxu0 0.0
    %272 = vmatprep.subr.mxu0 0.0
    %273 = vmatpush1.xpose.msra.mxu0 0.0
    %274 = vmatprep.subr.mxu0 0.0
    %275 = vmatpush1.xpose.msra.mxu0 0.0
    %276 = vmatprep.subr.mxu0 0.0
    %277 = vmatpush1.xpose.msra.mxu0 0.0
    %278 = vmatprep.subr.mxu0 0.0
    %279 = vmatpush1.xpose.msra.mxu0 0.0
    %280 = vmatprep.subr.mxu0 0.0
    %281 = vmatpush1.xpose.msra.mxu0 0.0
    %282 = vmatprep.subr.mxu0 0.0
    %283 = vmatpush1.xpose.msra.mxu0 0.0
    %284 = vmatprep.subr.mxu0 0.0
    %285 = vmatpush1.xpose.msra.mxu0 0.0
    %286 = vmatprep.subr.mxu0 0.0
    %287 = vmatpush1.xpose.msra.mxu0 0.0
    %288 = vmatprep.subr.mxu0 0.0
    %289 = vmatpush1.xpose.msra.mxu0 0.0
    %290 = vmatprep.subr.mxu0 0.0
    %291 = vmatpush1.xpose.msra.mxu0 %v253
    %292 = vmatprep.subr.mxu0 0.0
    %293 = vmatpush2.xpose.msra.mxu0 0.0
    %294 = vmatprep.subr.mxu0 0.0
    %295 = vmatpush2.xpose.msra.mxu0 0.0
    %296 = vmatprep.subr.mxu0 0.0
    %297 = vmatpush2.xpose.msra.mxu0 0.0
    %298 = vmatprep.subr.mxu0 0.0
    %299 = vmatpush2.xpose.msra.mxu0 0.0
    %300 = vmatprep.subr.mxu0 0.0
    %301 = vmatpush2.xpose.msra.mxu0 0.0
    %302 = vmatprep.subr.mxu0 0.0
    %303 = vmatpush2.xpose.msra.mxu0 0.0
    %304 = vmatprep.subr.mxu0 0.0
    %305 = vmatpush2.xpose.msra.mxu0 0.0
    %306 = vmatprep.subr.mxu0 0.0
    %307 = vmatpush2.xpose.msra.mxu0 0.0
    %308 = vmatprep.subr.mxu0 0.0
    %309 = vmatpush2.xpose.msra.mxu0 0.0
    %310 = vmatprep.subr.mxu0 0.0
    %311 = vmatpush2.xpose.msra.mxu0 0.0
    %312 = vmatprep.subr.mxu0 0.0
    %313 = vmatpush2.xpose.msra.mxu0 0.0
    %314 = vmatprep.subr.mxu0 0.0
    %315 = vmatpush2.xpose.msra.mxu0 0.0
    %316 = vmatprep.subr.mxu0 0.0
    %317 = vmatpush2.xpose.msra.mxu0 0.0
    %318 = vmatprep.subr.mxu0 0.0
    %319 = vmatpush2.xpose.msra.mxu0 0.0
    %320 = vmatprep.subr.mxu0 0.0
    %321 = vmatpush2.xpose.msra.mxu0 0.0
    %322 = vmatprep.subr.mxu0 0.0
    %323 = vmatpush2.xpose.msra.mxu0 0.0
    %324 = vmatprep.mubr.f32.mxu0 0.0
    %325 = vmatmul.mubr.f32.gmra.mxu0 %v254
    %v326 = vpop.f32.mrf.mxu0
    %v327 = vadd.f32 %v258, %v326
    %v328 = vpop.f32.mrf.mxu0
    %329 = vdwg.mxu0
    %vm330 = vcmask 44032
    %331 = vst.msk [vmem:[#allocation10] sm:$0xf] %vm330, %v327
    // Predicated region
    $region34: #{tpu_custom_call.1} parent=1 // pred_check
      _
    $region35: #{tpu_custom_call.1} parent=1 // pred_check_branch
      %333 = sbr.rel (0) target = $region37
    $region36: #{tpu_custom_call.1} parent=1 // pred_region
      %s335 = ssub.s32 64, 64
      %336 = vsyncadd [#allocation4], %s335
      %s338 = sshll.u32 [#allocation10], 4
      %s339 = int_to_ptr.vmem [resolvable:$true] %s338
      %341 = dma.vmem_to_hbm [thread:$0]  %s339, 64, %s4, [#allocation4]
    $region37: #{tpu_custom_call.1} parent=1 // pred_fallthru
      _
    // Predicated region
    $region38: #{tpu_custom_call.1} parent=1 // pred_check
      _
    $region39: #{tpu_custom_call.1} parent=1 // pred_check_branch
      %343 = sbr.rel (0) target = $region41
    $region40: #{tpu_custom_call.1} parent=1 // pred_region
      %344 = dma.done [#allocation4], 64
    $region41: #{tpu_custom_call.1} parent=1 // pred_fallthru
      _
    %345 = vsyncpa [#allocation3], 1
    %346 = vsyncpa [#allocation6], 1
    %347 = vsyncpa [#allocation9], 1
    %348 = vsyncpa [#allocation4], 1

</llo_original>
